<compile_context>
chip_gen: v6e
topology: v6e:2x2x1
jax: 0.10.0
libtpu: 0.0.40
codegen_flags: <defaults>
</compile_context>

<pallas_src>
import functools

import jax
import jax.numpy as jnp
from jax.experimental import pallas as pl
from jax.experimental.pallas import tpu as pltpu


def moral_ground_kernel(situ_ref, wkq_ref, bkq_ref, vop1_ref, wp2_ref,
                        bfold_ref, wc_ref, bc_ref, pred_ref, *, num_heads):
    f32 = jnp.float32
    Bt = situ_ref.shape[0]
    HG = wkq_ref.shape[1]
    G = HG // num_heads

    situ = situ_ref[...]                                            # (Bt, D)

    # Attention scores: Wk and the head-masked q rows (mg@Wq+bq) are pre-folded
    # into wkq/bkq in the wrapper, so this is the only matmul on the q/k path.
    scores = jnp.dot(situ, wkq_ref[...],
                     preferred_element_type=f32) + bkq_ref[...]     # (Bt, H*G)

    # Per-head softmax over grounds: one reduce per op on the (Bt, H, G) view
    # instead of H full-width masked max passes.
    s3 = scores.reshape(Bt, num_heads, G)
    m = jnp.max(s3, axis=-1, keepdims=True)
    e = jnp.exp(s3 - m)
    den = jnp.sum(e, axis=-1, keepdims=True)
    # NOTE: pl.reciprocal(den, approx=True) would move this divide to the EUP slot;
    # kept exact (reviewer's fallback option) to preserve the 1e-4 reference match.
    p = (e / den).reshape(Bt, HG)                                   # p[b, h*G+g]

    # grounds-sum of (p_attn * v) with Wo@Wp1 folded into vop1 (exact algebra):
    #   sum_g((p*v)@Wo + bo)@Wp1 + situ@Wp2 + bp
    #     == p @ (vsel@Wo@Wp1) + situ@Wp2 + (G*bo@Wp1 + bp)
    logits = (jnp.dot(p, vop1_ref[...], preferred_element_type=f32)
              + jnp.dot(situ, wp2_ref[...], preferred_element_type=f32)
              + bfold_ref[...])                                     # (Bt, D)
    logits = jnp.maximum(logits, 0.0)

    # Classifier + softmax over lane-padded classes; padded columns carry a -1e30
    # bias so exp underflows to exactly 0 and real-class probabilities are unchanged.
    cls = jnp.dot(logits, wc_ref[...],
                  preferred_element_type=f32) + bc_ref[...]         # (Bt, C_pad)
    cm = jnp.max(cls, axis=-1, keepdims=True)
    ce = jnp.exp(cls - cm)
    pred_ref[...] = ce / jnp.sum(ce, axis=-1, keepdims=True)


def moral_ground_forward(situation, mg, params, h, block_b=512):
    """situation: (B, D) [CLS] embeddings; mg: (G, D) shared moral-ground matrix."""
    B, D = situation.shape
    G, D2 = mg.shape
    assert D2 == D
    assert D % h == 0, "d_model must equal h * d_k with contiguous per-head blocks"
    assert block_b % 8 == 0
    dk = D // h
    HG = h * G
    C = params["wc_t"].shape[1]
    f32 = jnp.float32

    # ---- one-time parameter prep: every batch-invariant op is hoisted out of the
    # kernel and folded into weights (runs once, not once per grid step) ----
    q = mg @ params["wq_t"] + params["bq"]                          # (G, D)
    v = mg @ params["wv_t"] + params["bv"]                          # (G, D)
    head_of_n = jnp.arange(HG) // G                                 # n = head*G + g
    head_of_j = jnp.arange(D) // dk
    sel = (head_of_n[:, None] == head_of_j[None, :]).astype(f32)    # (HG, D)
    qsel = jnp.tile(q, (h, 1)) * sel                                # head-masked q rows
    vsel = jnp.tile(v, (h, 1)) * sel                                # head-masked v rows

    # Fold Wk into the q side:  scores = (situ@Wk + bk) @ qsel.T
    #                                  = situ @ (Wk@qsel.T) + bk@qsel.T
    wkq = params["wk_t"] @ qsel.T                                   # (D, HG)
    bkq = params["bk"] @ qsel.T                                     # (1, HG)
    # Fold Wo@Wp1 through the grounds-sum into the v side.
    vop1 = vsel @ (params["wo_t"] @ params["wp1_t"])                # (HG, D)
    bfold = G * (params["bo"] @ params["wp1_t"]) + params["bp"]     # (1, D)

    # Lane-dense classifier output: pad classes to a multiple of 128 so the output
    # slab is stored unmasked; padded classes get a -1e30 bias (softmax mass ~ 0).
    C_pad = 128 * pl.cdiv(C, 128)
    wc_pad = jnp.zeros((D, C_pad), f32).at[:, :C].set(params["wc_t"])
    bc_pad = jnp.full((1, C_pad), -1e30, f32).at[:, :C].set(params["bc"])

    # ---- batch blocking: aim for >= 2 grid steps whenever B > 8 so both v7x
    # TensorCores get work; Bt stays a multiple of 8 (bump to 16 for bf16). A tiny
    # batch uses one full-array block, the only case where Bt need not be 8-aligned.
    if B <= 8:
        Bt, Bpad = B, B
    else:
        Bpad = 8 * pl.cdiv(B, 8)
        Bt = min(block_b, 8 * pl.cdiv(Bpad // 2, 8))
        Bpad = Bt * pl.cdiv(Bpad, Bt)
    situ = situation if Bpad == B else jnp.pad(situation, ((0, Bpad - B), (0, 0)))

    operands = [situ, wkq, bkq, vop1, params["wp2_t"], bfold, wc_pad, bc_pad]

    def const_spec(a):
        zeros = (0,) * a.ndim
        return pl.BlockSpec(a.shape, lambda b, _z=zeros: _z)        # constant block index

    in_specs = ([pl.BlockSpec((Bt, D), lambda b: (b, 0))]
                + [const_spec(a) for a in operands[1:]])

    # Scoped-VMEM budget from actual per-step usage: double-buffered (Bt,D) input
    # block + (Bt,C_pad) output block + 2x-buffered constants + intermediates.
    const_bytes = sum(int(a.size) * a.dtype.itemsize for a in operands[1:])
    block_bytes = (Bt * D + Bt * C_pad) * 4
    interm_bytes = Bt * (3 * HG + 3 * D + 2 * C_pad) * 4
    vmem_est = 2 * const_bytes + 2 * block_bytes + interm_bytes + (4 << 20)
    vmem_limit = int(min(max(vmem_est, 16 << 20), 48 << 20))        # < v7x 64 MiB

    pred = pl.pallas_call(
        functools.partial(moral_ground_kernel, num_heads=h),
        out_shape=jax.ShapeDtypeStruct((Bpad, C_pad), f32),
        grid_spec=pltpu.PrefetchScalarGridSpec(
            num_scalar_prefetch=0,
            grid=(Bpad // Bt,),
            in_specs=in_specs,
            out_specs=pl.BlockSpec((Bt, C_pad), lambda b: (b, 0)),
        ),
        compiler_params=pltpu.CompilerParams(
            dimension_semantics=("parallel",),
            vmem_limit_bytes=vmem_limit),
    )(*operands)
    return pred[:B, :C]


def reference_forward(situation, mg_matrix, p, h):
    """Pure-JAX mirror of the PyTorch forward (for validation)."""
    B, G, D = mg_matrix.shape
    d_k = D // h
    q = mg_matrix @ p["wq_t"] + p["bq"]
    k = situation[:, None, :] @ p["wk_t"] + p["bk"]
    v = mg_matrix @ p["wv_t"] + p["bv"]
    q = q.reshape(B, G, h, d_k).transpose(0, 2, 1, 3)
    k = k.reshape(B, 1, h, d_k).transpose(0, 2, 1, 3)
    v = v.reshape(B, G, h, d_k).transpose(0, 2, 1, 3)
    scores = jnp.einsum("bhgd,bhkd->bhgk", q, k).sum(-1)
    pa = jax.nn.softmax(scores, axis=-1)[..., None]
    x = (pa * v).transpose(0, 2, 1, 3).reshape(B, G, D)
    attn_out = x @ p["wo_t"] + p["bo"]
    wsum = attn_out.sum(axis=-2)
    wp_t = jnp.concatenate([p["wp1_t"], p["wp2_t"]], axis=0)
    feat = jnp.concatenate([wsum, situation], axis=1)
    logits = jax.nn.relu(feat @ wp_t + p["bp"])
    cls = logits @ p["wc_t"] + p["bc"]
    return jax.nn.softmax(cls, axis=-1)


if __name__ == "__main__":
    # Small, module-consistent shapes.
    B = 2          # nbatches
    H = 4          # attention heads
    D = 32         # d_model
    G = 8          # d_grounds
    C = 2          # n_classes

    key = jax.random.PRNGKey(0)
    ks = jax.random.split(key, 16)

    def linear_init(kw, kb, fan_in, fan_out):
        bound = 1.0 / jnp.sqrt(fan_in)
        w_t = jax.random.uniform(kw, (fan_in, fan_out), jnp.float32, -bound, bound)
        b = jax.random.uniform(kb, (1, fan_out), jnp.float32, -bound, bound)
        return w_t, b

    wq_t, bq = linear_init(ks[0], ks[1], D, D)
    wk_t, bk = linear_init(ks[2], ks[3], D, D)
    wv_t, bv = linear_init(ks[4], ks[5], D, D)
    wo_t, bo = linear_init(ks[6], ks[7], D, D)
    wp_t, bp = linear_init(ks[8], ks[9], 2 * D, D)     # pre_classifier (2D -> D)
    wc_t, bc = linear_init(ks[10], ks[11], D, C)       # classifier

    # random_MG: xavier_uniform with gain = sqrt(2) (relu gain); shared by the batch.
    gain = jnp.sqrt(2.0)
    mg_bound = gain * jnp.sqrt(6.0 / (G + D))
    random_MG = jax.random.uniform(ks[12], (G, D), jnp.float32, -mg_bound, mg_bound)

    # situation: stand-in for the DistilBERT [CLS] hidden state.
    situation = jax.random.normal(ks[13], (B, D), jnp.float32)

    params = dict(
        wq_t=wq_t, bq=bq, wk_t=wk_t, bk=bk, wv_t=wv_t, bv=bv,
        wo_t=wo_t, bo=bo,
        wp1_t=wp_t[:D], wp2_t=wp_t[D:], bp=bp,
        wc_t=wc_t, bc=bc,
    )

    pred = moral_ground_forward(situation, random_MG, params, H)
    pred = jax.block_until_ready(pred)

    mg_matrix = jnp.tile(random_MG[None], (B, 1, 1))   # only for the reference mirror
    ref = reference_forward(situation, mg_matrix, params, H)
    assert pred.shape == (B, C)
    assert jnp.allclose(pred, ref, atol=1e-4, rtol=1e-4), (pred, ref)

    print("KERNEL_OK")
</pallas_src>

<mosaic_0001>
module attributes {stable_mosaic.version = 11 : i64} {
  func.func @moral_ground_kernel(%arg0: i32, %arg1: memref<2x32xf32, #tpu.memory_space<vmem>>, %arg2: memref<32x32xf32, #tpu.memory_space<vmem>>, %arg3: memref<1x32xf32, #tpu.memory_space<vmem>>, %arg4: memref<32x32xf32, #tpu.memory_space<vmem>>, %arg5: memref<32x32xf32, #tpu.memory_space<vmem>>, %arg6: memref<1x32xf32, #tpu.memory_space<vmem>>, %arg7: memref<32x128xf32, #tpu.memory_space<vmem>>, %arg8: memref<1x128xf32, #tpu.memory_space<vmem>>, %arg9: memref<2x128xf32, #tpu.memory_space<vmem>>) attributes {dimension_semantics = [#tpu.dimension_semantics<parallel>], iteration_bounds = array<i64: 1>, scalar_prefetch = 0 : i64, scratch_operands = 0 : i64, tpu.core_type = #tpu.core_type<tc>, window_params = [{transform_indices = @transform_0, window_bounds = array<i64: 2, 32>}, {pipeline_mode = #tpu.pipeline_mode<synchronous>, transform_indices = @transform_1, window_bounds = array<i64: 32, 32>}, {pipeline_mode = #tpu.pipeline_mode<synchronous>, transform_indices = @transform_2, window_bounds = array<i64: 1, 32>}, {pipeline_mode = #tpu.pipeline_mode<synchronous>, transform_indices = @transform_3, window_bounds = array<i64: 32, 32>}, {pipeline_mode = #tpu.pipeline_mode<synchronous>, transform_indices = @transform_4, window_bounds = array<i64: 32, 32>}, {pipeline_mode = #tpu.pipeline_mode<synchronous>, transform_indices = @transform_5, window_bounds = array<i64: 1, 32>}, {pipeline_mode = #tpu.pipeline_mode<synchronous>, transform_indices = @transform_6, window_bounds = array<i64: 32, 128>}, {pipeline_mode = #tpu.pipeline_mode<synchronous>, transform_indices = @transform_7, window_bounds = array<i64: 1, 128>}, {transform_indices = @transform_8, window_bounds = array<i64: 2, 128>}]} {
    %c0 = arith.constant 0 : index
    %c0_0 = arith.constant 0 : index
    %0 = vector.load %arg1[%c0, %c0_0] : memref<2x32xf32, #tpu.memory_space<vmem>>, vector<2x32xf32>
    %c0_1 = arith.constant 0 : index
    %c0_2 = arith.constant 0 : index
    %1 = vector.load %arg2[%c0_1, %c0_2] : memref<32x32xf32, #tpu.memory_space<vmem>>, vector<32x32xf32>
    %cst = arith.constant dense<0.000000e+00> : vector<2x32xf32>
    %2 = tpu.matmul %0, %1, %cst {dimension_numbers = #tpu.dot_dimension_numbers<[1], [0], [0], [1], [0, 0, 1, 1], [], []>} : vector<2x32xf32>, vector<32x32xf32>, vector<2x32xf32> -> vector<2x32xf32>
    %c0_3 = arith.constant 0 : index
    %c0_4 = arith.constant 0 : index
    %3 = vector.load %arg3[%c0_3, %c0_4] : memref<1x32xf32, #tpu.memory_space<vmem>>, vector<1x32xf32>
    %4 = vector.broadcast %3 : vector<1x32xf32> to vector<2x32xf32>
    %5 = arith.addf %2, %4 : vector<2x32xf32>
    %6 = vector.shape_cast %5 : vector<2x32xf32> to vector<2x4x8xf32>
    %cst_5 = arith.constant dense<0xFF800000> : vector<2x4xf32>
    %7 = vector.multi_reduction <maximumf>, %6, %cst_5 [2] : vector<2x4x8xf32> to vector<2x4xf32>
    %8 = vector.shape_cast %7 : vector<2x4xf32> to vector<2x4x1xf32>
    %9 = vector.broadcast %8 : vector<2x4x1xf32> to vector<2x4x8xf32>
    %10 = arith.subf %6, %9 : vector<2x4x8xf32>
    %11 = math.exp %10 : vector<2x4x8xf32>
    %cst_6 = arith.constant dense<0.000000e+00> : vector<2x4xf32>
    %12 = vector.multi_reduction <add>, %11, %cst_6 [2] : vector<2x4x8xf32> to vector<2x4xf32>
    %13 = vector.shape_cast %12 : vector<2x4xf32> to vector<2x4x1xf32>
    %14 = vector.broadcast %13 : vector<2x4x1xf32> to vector<2x4x8xf32>
    %15 = arith.divf %11, %14 : vector<2x4x8xf32>
    %16 = vector.shape_cast %15 : vector<2x4x8xf32> to vector<2x32xf32>
    %c0_7 = arith.constant 0 : index
    %c0_8 = arith.constant 0 : index
    %17 = vector.load %arg4[%c0_7, %c0_8] : memref<32x32xf32, #tpu.memory_space<vmem>>, vector<32x32xf32>
    %cst_9 = arith.constant dense<0.000000e+00> : vector<2x32xf32>
    %18 = tpu.matmul %16, %17, %cst_9 {dimension_numbers = #tpu.dot_dimension_numbers<[1], [0], [0], [1], [0, 0, 1, 1], [], []>} : vector<2x32xf32>, vector<32x32xf32>, vector<2x32xf32> -> vector<2x32xf32>
    %c0_10 = arith.constant 0 : index
    %c0_11 = arith.constant 0 : index
    %19 = vector.load %arg5[%c0_10, %c0_11] : memref<32x32xf32, #tpu.memory_space<vmem>>, vector<32x32xf32>
    %cst_12 = arith.constant dense<0.000000e+00> : vector<2x32xf32>
    %20 = tpu.matmul %0, %19, %cst_12 {dimension_numbers = #tpu.dot_dimension_numbers<[1], [0], [0], [1], [0, 0, 1, 1], [], []>} : vector<2x32xf32>, vector<32x32xf32>, vector<2x32xf32> -> vector<2x32xf32>
    %21 = arith.addf %18, %20 : vector<2x32xf32>
    %c0_13 = arith.constant 0 : index
    %c0_14 = arith.constant 0 : index
    %22 = vector.load %arg6[%c0_13, %c0_14] : memref<1x32xf32, #tpu.memory_space<vmem>>, vector<1x32xf32>
    %23 = vector.broadcast %22 : vector<1x32xf32> to vector<2x32xf32>
    %24 = arith.addf %21, %23 : vector<2x32xf32>
    %cst_15 = arith.constant 0.000000e+00 : f32
    %25 = vector.broadcast %cst_15 : f32 to vector<2x32xf32>
    %26 = arith.maximumf %24, %25 : vector<2x32xf32>
    %c0_16 = arith.constant 0 : index
    %c0_17 = arith.constant 0 : index
    %27 = vector.load %arg7[%c0_16, %c0_17] : memref<32x128xf32, #tpu.memory_space<vmem>>, vector<32x128xf32>
    %cst_18 = arith.constant dense<0.000000e+00> : vector<2x128xf32>
    %28 = tpu.matmul %26, %27, %cst_18 {dimension_numbers = #tpu.dot_dimension_numbers<[1], [0], [0], [1], [0, 0, 1, 1], [], []>} : vector<2x32xf32>, vector<32x128xf32>, vector<2x128xf32> -> vector<2x128xf32>
    %c0_19 = arith.constant 0 : index
    %c0_20 = arith.constant 0 : index
    %29 = vector.load %arg8[%c0_19, %c0_20] : memref<1x128xf32, #tpu.memory_space<vmem>>, vector<1x128xf32>
    %30 = vector.broadcast %29 : vector<1x128xf32> to vector<2x128xf32>
    %31 = arith.addf %28, %30 : vector<2x128xf32>
    %cst_21 = arith.constant dense<0xFF800000> : vector<2xf32>
    %32 = vector.multi_reduction <maximumf>, %31, %cst_21 [1] : vector<2x128xf32> to vector<2xf32>
    %33 = vector.shape_cast %32 : vector<2xf32> to vector<2x1xf32>
    %34 = vector.broadcast %33 : vector<2x1xf32> to vector<2x128xf32>
    %35 = arith.subf %31, %34 : vector<2x128xf32>
    %36 = math.exp %35 : vector<2x128xf32>
    %cst_22 = arith.constant dense<0.000000e+00> : vector<2xf32>
    %37 = vector.multi_reduction <add>, %36, %cst_22 [1] : vector<2x128xf32> to vector<2xf32>
    %38 = vector.shape_cast %37 : vector<2xf32> to vector<2x1xf32>
    %39 = vector.broadcast %38 : vector<2x1xf32> to vector<2x128xf32>
    %40 = arith.divf %36, %39 : vector<2x128xf32>
    %c0_23 = arith.constant 0 : index
    %c0_24 = arith.constant 0 : index
    %41 = vector.load %arg9[%c0_23, %c0_24] : memref<2x128xf32, #tpu.memory_space<vmem>>, vector<2x128xf32>
    tpu.vector_store %arg9[%c0_23, %c0_24], %40 {strides = array<i32>} : memref<2x128xf32, #tpu.memory_space<vmem>>, vector<2x128xf32>,
    return
  }
  func.func @transform_0(%arg0: i32) -> (i32, i32) {
    %c0_i32 = arith.constant 0 : i32
    %c0_i32_0 = arith.constant 0 : i32
    return %arg0, %c0_i32 : i32, i32
  }
  func.func @transform_1(%arg0: i32) -> (i32, i32) {
    %c0_i32 = arith.constant 0 : i32
    %c0_i32_0 = arith.constant 0 : i32
    %c0_i32_1 = arith.constant 0 : i32
    return %c0_i32, %c0_i32_0 : i32, i32
  }
  func.func @transform_2(%arg0: i32) -> (i32, i32) {
    %c0_i32 = arith.constant 0 : i32
    %c0_i32_0 = arith.constant 0 : i32
    %c0_i32_1 = arith.constant 0 : i32
    return %c0_i32, %c0_i32_0 : i32, i32
  }
  func.func @transform_3(%arg0: i32) -> (i32, i32) {
    %c0_i32 = arith.constant 0 : i32
    %c0_i32_0 = arith.constant 0 : i32
    %c0_i32_1 = arith.constant 0 : i32
    return %c0_i32, %c0_i32_0 : i32, i32
  }
  func.func @transform_4(%arg0: i32) -> (i32, i32) {
    %c0_i32 = arith.constant 0 : i32
    %c0_i32_0 = arith.constant 0 : i32
    %c0_i32_1 = arith.constant 0 : i32
    return %c0_i32, %c0_i32_0 : i32, i32
  }
  func.func @transform_5(%arg0: i32) -> (i32, i32) {
    %c0_i32 = arith.constant 0 : i32
    %c0_i32_0 = arith.constant 0 : i32
    %c0_i32_1 = arith.constant 0 : i32
    return %c0_i32, %c0_i32_0 : i32, i32
  }
  func.func @transform_6(%arg0: i32) -> (i32, i32) {
    %c0_i32 = arith.constant 0 : i32
    %c0_i32_0 = arith.constant 0 : i32
    %c0_i32_1 = arith.constant 0 : i32
    return %c0_i32, %c0_i32_0 : i32, i32
  }
  func.func @transform_7(%arg0: i32) -> (i32, i32) {
    %c0_i32 = arith.constant 0 : i32
    %c0_i32_0 = arith.constant 0 : i32
    %c0_i32_1 = arith.constant 0 : i32
    return %c0_i32, %c0_i32_0 : i32, i32
  }
  func.func @transform_8(%arg0: i32) -> (i32, i32) {
    %c0_i32 = arith.constant 0 : i32
    %c0_i32_0 = arith.constant 0 : i32
    return %arg0, %c0_i32 : i32, i32
  }
}

</mosaic_0001>

<llo_original>
// kernel: tpu_custom_call.1
$region0: #{tpu_custom_call.1}
  #allocation0 [shape = 'u32[]', space=smem, size = 0x4, offset = 0x4, fixed_abs, tag = 'smem constant byte address 0x4 - core index']
  #allocation1 [shape = 'u32[144,128]{1,0:T(1,128)}', space=vmem, size = 0x12000, scoped, tag = 'internal scratch']
  %s0 = inlined_call_operand.hbm [shape: f32[2,32], index: 0, kind: input, shape index: {}]
  %s1 = inlined_call_operand.hbm [shape: f32[32,32], index: 1, kind: input, shape index: {}]
  %s2 = inlined_call_operand.vmem [shape: f32[1,32], index: 2, kind: input, shape index: {}]
  %s3 = inlined_call_operand.hbm [shape: f32[32,32], index: 3, kind: input, shape index: {}]
  %s4 = inlined_call_operand.hbm [shape: f32[32,32], index: 4, kind: input, shape index: {}]
  %s5 = inlined_call_operand.vmem [shape: f32[1,32], index: 5, kind: input, shape index: {}]
  %s6 = inlined_call_operand.hbm [shape: f32[32,128], index: 6, kind: input, shape index: {}]
  %s7 = inlined_call_operand.vmem [shape: f32[1,128], index: 7, kind: input, shape index: {}]
  %s8 = inlined_call_operand.hbm [shape: f32[2,128], index: 8, kind: output, shape index: {}]
  %s9 = sld [smem:[#allocation0]]
  $region62: #{tpu_custom_call.1} parent=0
    _
  %s11 = ssub.s32 1, %s9
  %s12 = scalar_select 0, %s11, %s9
  $region1: #{tpu_custom_call.1} parent=0
    #allocation2 [shape = 'u8[1024]{0}', space=vmem, size = 0x400, scoped, tag = 'input window, operand 0, single buffered']
    #allocation3 [shape = 's32[1]{0}', space=sflag, size = 0x4, scoped, tag = 'scoped memory for tpu_custom_call.1']
    #allocation4 [shape = 's32[1]{0}', space=sflag, size = 0x4, scoped, tag = 'scoped memory for tpu_custom_call.1']
    #allocation5 [shape = 'u8[16384]{0}', space=vmem, size = 0x4000, scoped, tag = 'input window, operand 1, single buffered']
    #allocation6 [shape = 's32[1]{0}', space=sflag, size = 0x4, scoped, tag = 'scoped memory for tpu_custom_call.1']
    #allocation7 [shape = 'u8[16384]{0}', space=vmem, size = 0x4000, scoped, tag = 'input window, operand 3, single buffered']
    #allocation8 [shape = 'u8[16384]{0}', space=vmem, size = 0x4000, scoped, tag = 'input window, operand 4, single buffered']
    #allocation9 [shape = 's32[1]{0}', space=sflag, size = 0x4, scoped, tag = 'scoped memory for tpu_custom_call.1']
    #allocation10 [shape = 'u8[16384]{0}', space=vmem, size = 0x4000, scoped, tag = 'input window, operand 6, single buffered']
    #allocation11 [shape = 'u8[1024]{0}', space=vmem, size = 0x400, scoped, tag = 'output window, operand 0, single buffered']
    %13 = vsyncpa [#allocation3], 0
    %14 = vsyncpa [#allocation6], 0
    %15 = vsyncpa [#allocation9], 0
    %16 = vsyncpa [#allocation4], 0
    // Predicated region
    $region2: #{tpu_custom_call.1} parent=1 // pred_check
      _
    $region3: #{tpu_custom_call.1} parent=1 // pred_check_branch
      %18 = sbr.rel (0) target = $region5
    $region4: #{tpu_custom_call.1} parent=1 // pred_region
      %s20 = ssub.s32 32, 32
      %21 = vsyncadd [#allocation3], %s20
      %s23 = sshll.u32 [#allocation2], 4
      %s24 = int_to_ptr.vmem [resolvable:$true] %s23
      %26 = dma.hbm_to_vmem [thread:$0]  %s0, 32, %s24, [#allocation3]
    $region5: #{tpu_custom_call.1} parent=1 // pred_fallthru
      _
    // Predicated region
    $region6: #{tpu_custom_call.1} parent=1 // pred_check
      _
    $region7: #{tpu_custom_call.1} parent=1 // pred_check_branch
      %28 = sbr.rel (0) target = $region9
    $region8: #{tpu_custom_call.1} parent=1 // pred_region
      %s30 = ssub.s32 512, 512
      %31 = vsyncadd [#allocation6], %s30
      %s32 = sshll.u32 [#allocation5], 4
      %s33 = int_to_ptr.vmem [resolvable:$true] %s32
      %38 = dma.hbm_to_vmem [thread:$0]  %s1, 512, %s33, [#allocation6], 128, 128, 8
    $region9: #{tpu_custom_call.1} parent=1 // pred_fallthru
      _
    // Predicated region
    $region10: #{tpu_custom_call.1} parent=1 // pred_check
      _
    $region11: #{tpu_custom_call.1} parent=1 // pred_check_branch
      %40 = sbr.rel (0) target = $region13
    $region12: #{tpu_custom_call.1} parent=1 // pred_region
      _
    $region13: #{tpu_custom_call.1} parent=1 // pred_fallthru
      _
    // Predicated region
    $region14: #{tpu_custom_call.1} parent=1 // pred_check
      _
    $region15: #{tpu_custom_call.1} parent=1 // pred_check_branch
      %42 = sbr.rel (0) target = $region17
    $region16: #{tpu_custom_call.1} parent=1 // pred_region
      %s44 = ssub.s32 512, 512
      %45 = vsyncadd [#allocation6], %s44
      %s46 = sshll.u32 [#allocation7], 4
      %s47 = int_to_ptr.vmem [resolvable:$true] %s46
      %52 = dma.hbm_to_vmem [thread:$0]  %s3, 512, %s47, [#allocation6], 128, 128, 8
    $region17: #{tpu_custom_call.1} parent=1 // pred_fallthru
      _
    // Predicated region
    $region18: #{tpu_custom_call.1} parent=1 // pred_check
      _
    $region19: #{tpu_custom_call.1} parent=1 // pred_check_branch
      %54 = sbr.rel (0) target = $region21
    $region20: #{tpu_custom_call.1} parent=1 // pred_region
      %s56 = ssub.s32 512, 512
      %57 = vsyncadd [#allocation9], %s56
      %s58 = sshll.u32 [#allocation8], 4
      %s59 = int_to_ptr.vmem [resolvable:$true] %s58
      %64 = dma.hbm_to_vmem [thread:$0]  %s4, 512, %s59, [#allocation9], 128, 128, 8
    $region21: #{tpu_custom_call.1} parent=1 // pred_fallthru
      _
    // Predicated region
    $region22: #{tpu_custom_call.1} parent=1 // pred_check
      _
    $region23: #{tpu_custom_call.1} parent=1 // pred_check_branch
      %66 = sbr.rel (0) target = $region25
    $region24: #{tpu_custom_call.1} parent=1 // pred_region
      _
    $region25: #{tpu_custom_call.1} parent=1 // pred_fallthru
      _
    // Predicated region
    $region26: #{tpu_custom_call.1} parent=1 // pred_check
      _
    $region27: #{tpu_custom_call.1} parent=1 // pred_check_branch
      %68 = sbr.rel (0) target = $region29
    $region28: #{tpu_custom_call.1} parent=1 // pred_region
      %s70 = ssub.s32 512, 512
      %71 = vsyncadd [#allocation9], %s70
      %s72 = sshll.u32 [#allocation10], 4
      %s73 = int_to_ptr.vmem [resolvable:$true] %s72
      %78 = dma.hbm_to_vmem [thread:$0]  %s6, 512, %s73, [#allocation9], 128, 128, 8
    $region29: #{tpu_custom_call.1} parent=1 // pred_fallthru
      _
    // Predicated region
    $region30: #{tpu_custom_call.1} parent=1 // pred_check
      _
    $region31: #{tpu_custom_call.1} parent=1 // pred_check_branch
      %80 = sbr.rel (0) target = $region33
    $region32: #{tpu_custom_call.1} parent=1 // pred_region
      _
    $region33: #{tpu_custom_call.1} parent=1 // pred_fallthru
      _
    // Predicated region
    $region34: #{tpu_custom_call.1} parent=1 // pred_check
      _
    $region35: #{tpu_custom_call.1} parent=1 // pred_check_branch
      %82 = sbr.rel (0) target = $region37
    $region36: #{tpu_custom_call.1} parent=1 // pred_region
      %83 = dma.done [#allocation3], 32
    $region37: #{tpu_custom_call.1} parent=1 // pred_fallthru
      _
    // Predicated region
    $region38: #{tpu_custom_call.1} parent=1 // pred_check
      _
    $region39: #{tpu_custom_call.1} parent=1 // pred_check_branch
      %85 = sbr.rel (0) target = $region41
    $region40: #{tpu_custom_call.1} parent=1 // pred_region
      %86 = dma.done [#allocation6], 512
    $region41: #{tpu_custom_call.1} parent=1 // pred_fallthru
      _
    // Predicated region
    $region42: #{tpu_custom_call.1} parent=1 // pred_check
      _
    $region43: #{tpu_custom_call.1} parent=1 // pred_check_branch
      %88 = sbr.rel (0) target = $region45
    $region44: #{tpu_custom_call.1} parent=1 // pred_region
      %89 = dma.done [#allocation6], 512
    $region45: #{tpu_custom_call.1} parent=1 // pred_fallthru
      _
    // Predicated region
    $region46: #{tpu_custom_call.1} parent=1 // pred_check
      _
    $region47: #{tpu_custom_call.1} parent=1 // pred_check_branch
      %91 = sbr.rel (0) target = $region49
    $region48: #{tpu_custom_call.1} parent=1 // pred_region
      %92 = dma.done [#allocation9], 512
    $region49: #{tpu_custom_call.1} parent=1 // pred_fallthru
      _
    // Predicated region
    $region50: #{tpu_custom_call.1} parent=1 // pred_check
      _
    $region51: #{tpu_custom_call.1} parent=1 // pred_check_branch
      %94 = sbr.rel (0) target = $region53
    $region52: #{tpu_custom_call.1} parent=1 // pred_region
      %95 = dma.done [#allocation9], 512
    $region53: #{tpu_custom_call.1} parent=1 // pred_fallthru
      _
    %v96 = vld [vmem:[#allocation2] sm:$0x3]
    %v97 = vld [vmem:[#allocation5] sm:$0xff]
    %v98 = vld [vmem:[#allocation5 + $0x8] sm:$0xff]
    %v99 = vld [vmem:[#allocation5 + $0x10] sm:$0xff]
    %v100 = vld [vmem:[#allocation5 + $0x18] sm:$0xff]
    %v101 = vld [vmem:[%s2] sm:$0x1]
    %v103 = vlaneseq
    %v104 = vshrl.u32 %v103, 7
    %v105 = vsub.s32 0, %v104
    %v106 = vrot.slane %v101, %v105
    %vm108 = vcmask 261120
    %v110 = vsel %vm108, %v96, 0
    %112 = vmatprep.subr.mxu0 0.0
    %113 = vmatpush1.msra.mxu0 0.0
    %114 = vmatprep.subr.mxu0 0.0
    %115 = vmatpush1.msra.mxu0 0.0
    %116 = vmatprep.subr.mxu0 0.0
    %117 = vmatpush1.msra.mxu0 0.0
    %118 = vmatprep.subr.mxu0 0.0
    %119 = vmatpush1.msra.mxu0 0.0
    %120 = vmatprep.subr.mxu0 0.0
    %121 = vmatpush1.msra.mxu0 0.0
    %122 = vmatprep.subr.mxu0 0.0
    %123 = vmatpush1.msra.mxu0 0.0
    %124 = vmatprep.subr.mxu0 0.0
    %125 = vmatpush1.msra.mxu0 0.0
    %126 = vmatprep.subr.mxu0 0.0
    %127 = vmatpush1.msra.mxu0 0.0
    %128 = vmatprep.subr.mxu0 0.0
    %129 = vmatpush1.msra.mxu0 0.0
    %130 = vmatprep.subr.mxu0 0.0
    %131 = vmatpush1.msra.mxu0 0.0
    %132 = vmatprep.subr.mxu0 0.0
    %133 = vmatpush1.msra.mxu0 0.0
    %134 = vmatprep.subr.mxu0 0.0
    %135 = vmatpush1.msra.mxu0 0.0
    %136 = vmatprep.subr.mxu0 0.0
    %137 = vmatpush1.msra.mxu0 %v100
    %138 = vmatprep.subr.mxu0 0.0
    %139 = vmatpush1.msra.mxu0 %v99
    %140 = vmatprep.subr.mxu0 0.0
    %141 = vmatpush1.msra.mxu0 %v98
    %142 = vmatprep.subr.mxu0 0.0
    %143 = vmatpush1.msra.mxu0 %v97
    %144 = vmatprep.subr.mxu0 0.0
    %145 = vmatpush2.msra.mxu0 0.0
    %146 = vmatprep.subr.mxu0 0.0
    %147 = vmatpush2.msra.mxu0 0.0
    %148 = vmatprep.subr.mxu0 0.0
    %149 = vmatpush2.msra.mxu0 0.0
    %150 = vmatprep.subr.mxu0 0.0
    %151 = vmatpush2.msra.mxu0 0.0
    %152 = vmatprep.subr.mxu0 0.0
    %153 = vmatpush2.msra.mxu0 0.0
    %154 = vmatprep.subr.mxu0 0.0
    %155 = vmatpush2.msra.mxu0 0.0
    %156 = vmatprep.subr.mxu0 0.0
    %157 = vmatpush2.msra.mxu0 0.0
    %158 = vmatprep.subr.mxu0 0.0
    %159 = vmatpush2.msra.mxu0 0.0
    %160 = vmatprep.subr.mxu0 0.0
    %161 = vmatpush2.msra.mxu0 0.0
    %162 = vmatprep.subr.mxu0 0.0
    %163 = vmatpush2.msra.mxu0 0.0
    %164 = vmatprep.subr.mxu0 0.0
    %165 = vmatpush2.msra.mxu0 0.0
    %166 = vmatprep.subr.mxu0 0.0
    %167 = vmatpush2.msra.mxu0 0.0
    %168 = vmatprep.subr.mxu0 0.0
    %169 = vmatpush2.msra.mxu0 0.0
    %170 = vmatprep.subr.mxu0 0.0
    %171 = vmatpush2.msra.mxu0 0.0
    %172 = vmatprep.subr.mxu0 0.0
    %173 = vmatpush2.msra.mxu0 0.0
    %174 = vmatprep.subr.mxu0 0.0
    %175 = vmatpush2.msra.mxu0 0.0
    %176 = vmatprep.mubr.f32.mxu0 0.0
    %177 = vmatmul.mubr.f32.gmra.mxu0 %v110
    %v178 = vpop.f32.mrf.mxu0
    %v179 = vadd.f32 %v106, %v178
    %v180 = vpop.f32.mrf.mxu0
    %181 = vdwg.mxu0
    %183 = vrot.lane.b32.xlu0 %v179, 120
    %v184 = vpop.permute.xlu0 %183
    %186 = vrot.lane.b32.xlu0 %v179, 112
    %v187 = vpop.permute.xlu0 %186
    %189 = vrot.lane.b32.xlu0 %v179, 104
    %v190 = vpop.permute.xlu0 %189
    %v192 = vcombine.low %v179, %v187
    %v194 = vunpack.c.l.s4 1983009808
    %v195 = vunpack.c.0.s8 %v194
    %v196 = vlaneseq
    %v197 = vshrl.u32 %v196, 7
    %v198 = vsub.s32 %v195, %v197
    %v199 = vrot.slane %v192, %v198
    %v200 = vcombine.low %v184, %v190
    %v202 = vunpack.c.l.s4 1983009808
    %v203 = vunpack.c.0.s8 %v202
    %v204 = vlaneseq
    %v205 = vshrl.u32 %v204, 7
    %v206 = vsub.s32 %v203, %v205
    %v207 = vrot.slane %v200, %v206
    %v208 = vcombine.low %v199, %v207
    %v210 = vunpack.c.l.s4 1934713408
    %v211 = vunpack.c.0.s8 %v210
    %v212 = vlaneseq
    %v213 = vshrl.u32 %v212, 7
    %v214 = vsub.s32 %v211, %v213
    %v215 = vrot.slane %v208, %v214
    %v216 = vcombine.high %v215, 0.0
    %vm217 = vcmask 60416
    %v218 = vsel %vm217, %v215, -inf
    %219 = vmax.xlane.f32.xlu0 %v218
    %v220 = vpop.xlane.xlu0 %219
    %v221 = vsel %vm217, %v216, -inf
    %222 = vmax.xlane.f32.xlu0 %v221
    %v223 = vpop.xlane.xlu0 %222
    %v224 = vsub.f32 %v215, %v220
    %v225 = vsub.f32 %v216, %v223
    %v226 = vmul.f32 %v224, 1.442695
    %v227 = vpow.pop %v226
    %v228 = vmul.f32 %v225, 1.442695
    %v229 = vpow.pop %v228
    %v230 = vsel %vm217, %v227, 0.0
    %231 = vadd.xlane.f32.xlu0 %v230
    %v232 = vpop.xlane.xlu0 %231
    %v233 = vsel %vm217, %v229, 0.0
    %234 = vadd.xlane.f32.xlu0 %v233
    %v235 = vpop.xlane.xlu0 %234
    %v236 = vrcp.pop %v232
    %v237 = vmul.f32 %v227, %v236
    %v239 = vunpack.c.l.s4 1983009808
    %v240 = vunpack.c.0.s8 %v239
    %v241 = vlaneseq
    %v242 = vshrl.u32 %v241, 7
    %v243 = vsub.s32 %v240, %v242
    %v244 = vrot.slane %v237, %v243
    %v245 = vrcp.pop %v235
    %v246 = vmul.f32 %v229, %v245
    %v248 = vunpack.c.l.s4 1983009808
    %v249 = vunpack.c.0.s8 %v248
    %v250 = vlaneseq
    %v251 = vshrl.u32 %v250, 7
    %v252 = vsub.s32 %v249, %v251
    %v253 = vrot.slane %v246, %v252
    %v254 = vcombine.low %v244, %v253
    %v255 = vcombine.high %v244, %v253
    %v257 = vunpack.c.l.s4 1934713408
    %v258 = vunpack.c.0.s8 %v257
    %v259 = vlaneseq
    %v260 = vshrl.u32 %v259, 7
    %v261 = vsub.s32 %v258, %v260
    %v262 = vrot.slane %v254, %v261
    %v264 = vunpack.c.l.s4 1934713408
    %v265 = vunpack.c.0.s8 %v264
    %v266 = vlaneseq
    %v267 = vshrl.u32 %v266, 7
    %v268 = vsub.s32 %v265, %v267
    %v269 = vrot.slane %v255, %v268
    %v270 = vcombine.high %v262, 0.0
    %v271 = vcombine.high %v269, 0.0
    %273 = vrot.lane.b32.xlu0 %v270, 8
    %v274 = vpop.permute.xlu0 %273
    %277 = vrot.lane.b32.xlu0 %v269, 16
    %v278 = vpop.permute.xlu0 %277
    %281 = vrot.lane.b32.xlu0 %v271, 24
    %v282 = vpop.permute.xlu0 %281
    %vm284 = vcmask 64512
    %v285 = vsel %vm284, %v262, %v274
    %vm286 = vcmask 130048
    %v287 = vsel %vm286, %v285, %v278
    %vm288 = vcmask 195584
    %v289 = vsel %vm288, %v287, %v282
    %v290 = vld [vmem:[#allocation7] sm:$0xff]
    %v291 = vld [vmem:[#allocation7 + $0x8] sm:$0xff]
    %v292 = vld [vmem:[#allocation7 + $0x10] sm:$0xff]
    %v293 = vld [vmem:[#allocation7 + $0x18] sm:$0xff]
    %v294 = vld [vmem:[#allocation8] sm:$0xff]
    %v295 = vld [vmem:[#allocation8 + $0x8] sm:$0xff]
    %v296 = vld [vmem:[#allocation8 + $0x10] sm:$0xff]
    %v297 = vld [vmem:[#allocation8 + $0x18] sm:$0xff]
    %298 = vmatprep.subr.mxu0 0.0
    %299 = vmatpush1.msra.mxu0 0.0
    %300 = vmatprep.subr.mxu0 0.0
    %301 = vmatpush1.msra.mxu0 0.0
    %302 = vmatprep.subr.mxu0 0.0
    %303 = vmatpush1.msra.mxu0 0.0
    %304 = vmatprep.subr.mxu0 0.0
    %305 = vmatpush1.msra.mxu0 0.0
    %306 = vmatprep.subr.mxu0 0.0
    %307 = vmatpush1.msra.mxu0 0.0
    %308 = vmatprep.subr.mxu0 0.0
    %309 = vmatpush1.msra.mxu0 0.0
    %310 = vmatprep.subr.mxu0 0.0
    %311 = vmatpush1.msra.mxu0 0.0
    %312 = vmatprep.subr.mxu0 0.0
    %313 = vmatpush1.msra.mxu0 0.0
    %314 = vmatprep.subr.mxu0 0.0
    %315 = vmatpush1.msra.mxu0 0.0
    %316 = vmatprep.subr.mxu0 0.0
    %317 = vmatpush1.msra.mxu0 0.0
    %318 = vmatprep.subr.mxu0 0.0
    %319 = vmatpush1.msra.mxu0 0.0
    %320 = vmatprep.subr.mxu0 0.0
    %321 = vmatpush1.msra.mxu0 0.0
    %322 = vmatprep.subr.mxu0 0.0
    %323 = vmatpush1.msra.mxu0 %v297
    %324 = vmatprep.subr.mxu0 0.0
    %325 = vmatpush1.msra.mxu0 %v296
    %326 = vmatprep.subr.mxu0 0.0
    %327 = vmatpush1.msra.mxu0 %v295
    %328 = vmatprep.subr.mxu0 0.0
    %329 = vmatpush1.msra.mxu0 %v294
    %330 = vmatprep.subr.mxu0 0.0
    %331 = vmatpush2.msra.mxu0 0.0
    %332 = vmatprep.subr.mxu0 0.0
    %333 = vmatpush2.msra.mxu0 0.0
    %334 = vmatprep.subr.mxu0 0.0
    %335 = vmatpush2.msra.mxu0 0.0
    %336 = vmatprep.subr.mxu0 0.0
    %337 = vmatpush2.msra.mxu0 0.0
    %338 = vmatprep.subr.mxu0 0.0
    %339 = vmatpush2.msra.mxu0 0.0
    %340 = vmatprep.subr.mxu0 0.0
    %341 = vmatpush2.msra.mxu0 0.0
    %342 = vmatprep.subr.mxu0 0.0
    %343 = vmatpush2.msra.mxu0 0.0
    %344 = vmatprep.subr.mxu0 0.0
    %345 = vmatpush2.msra.mxu0 0.0
    %346 = vmatprep.subr.mxu0 0.0
    %347 = vmatpush2.msra.mxu0 0.0
    %348 = vmatprep.subr.mxu0 0.0
    %349 = vmatpush2.msra.mxu0 0.0
    %350 = vmatprep.subr.mxu0 0.0
    %351 = vmatpush2.msra.mxu0 0.0
    %352 = vmatprep.subr.mxu0 0.0
    %353 = vmatpush2.msra.mxu0 0.0
    %354 = vmatprep.subr.mxu0 0.0
    %355 = vmatpush2.msra.mxu0 0.0
    %356 = vmatprep.subr.mxu0 0.0
    %357 = vmatpush2.msra.mxu0 0.0
    %358 = vmatprep.subr.mxu0 0.0
    %359 = vmatpush2.msra.mxu0 0.0
    %360 = vmatprep.subr.mxu0 0.0
    %361 = vmatpush2.msra.mxu0 0.0
    %362 = vmatprep.mubr.f32.mxu0 0.0
    %363 = vmatmul.mubr.f32.gmra.mxu0 %v110
    %v364 = vpop.f32.mrf.mxu0
    %v365 = vadd.f32 0.0, %v364
    %v366 = vpop.f32.mrf.mxu0
    %367 = vdwg.mxu0
    %v369 = vsel %vm108, %v289, 0
    %371 = vmatprep.subr.mxu0 0.0
    %372 = vmatpush1.msra.mxu0 0.0
    %373 = vmatprep.subr.mxu0 0.0
    %374 = vmatpush1.msra.mxu0 0.0
    %375 = vmatprep.subr.mxu0 0.0
    %376 = vmatpush1.msra.mxu0 0.0
    %377 = vmatprep.subr.mxu0 0.0
    %378 = vmatpush1.msra.mxu0 0.0
    %379 = vmatprep.subr.mxu0 0.0
    %380 = vmatpush1.msra.mxu0 0.0
    %381 = vmatprep.subr.mxu0 0.0
    %382 = vmatpush1.msra.mxu0 0.0
    %383 = vmatprep.subr.mxu0 0.0
    %384 = vmatpush1.msra.mxu0 0.0
    %385 = vmatprep.subr.mxu0 0.0
    %386 = vmatpush1.msra.mxu0 0.0
    %387 = vmatprep.subr.mxu0 0.0
    %388 = vmatpush1.msra.mxu0 0.0
    %389 = vmatprep.subr.mxu0 0.0
    %390 = vmatpush1.msra.mxu0 0.0
    %391 = vmatprep.subr.mxu0 0.0
    %392 = vmatpush1.msra.mxu0 0.0
    %393 = vmatprep.subr.mxu0 0.0
    %394 = vmatpush1.msra.mxu0 0.0
    %395 = vmatprep.subr.mxu0 0.0
    %396 = vmatpush1.msra.mxu0 %v293
    %397 = vmatprep.subr.mxu0 0.0
    %398 = vmatpush1.msra.mxu0 %v292
    %399 = vmatprep.subr.mxu0 0.0
    %400 = vmatpush1.msra.mxu0 %v291
    %401 = vmatprep.subr.mxu0 0.0
    %402 = vmatpush1.msra.mxu0 %v290
    %403 = vmatprep.subr.mxu0 0.0
    %404 = vmatpush2.msra.mxu0 0.0
    %405 = vmatprep.subr.mxu0 0.0
    %406 = vmatpush2.msra.mxu0 0.0
    %407 = vmatprep.subr.mxu0 0.0
    %408 = vmatpush2.msra.mxu0 0.0
    %409 = vmatprep.subr.mxu0 0.0
    %410 = vmatpush2.msra.mxu0 0.0
    %411 = vmatprep.subr.mxu0 0.0
    %412 = vmatpush2.msra.mxu0 0.0
    %413 = vmatprep.subr.mxu0 0.0
    %414 = vmatpush2.msra.mxu0 0.0
    %415 = vmatprep.subr.mxu0 0.0
    %416 = vmatpush2.msra.mxu0 0.0
    %417 = vmatprep.subr.mxu0 0.0
    %418 = vmatpush2.msra.mxu0 0.0
    %419 = vmatprep.subr.mxu0 0.0
    %420 = vmatpush2.msra.mxu0 0.0
    %421 = vmatprep.subr.mxu0 0.0
    %422 = vmatpush2.msra.mxu0 0.0
    %423 = vmatprep.subr.mxu0 0.0
    %424 = vmatpush2.msra.mxu0 0.0
    %425 = vmatprep.subr.mxu0 0.0
    %426 = vmatpush2.msra.mxu0 0.0
    %427 = vmatprep.subr.mxu0 0.0
    %428 = vmatpush2.msra.mxu0 0.0
    %429 = vmatprep.subr.mxu0 0.0
    %430 = vmatpush2.msra.mxu0 0.0
    %431 = vmatprep.subr.mxu0 0.0
    %432 = vmatpush2.msra.mxu0 0.0
    %433 = vmatprep.subr.mxu0 0.0
    %434 = vmatpush2.msra.mxu0 0.0
    %435 = vmatprep.mubr.f32.mxu0 0.0
    %436 = vmatmul.mubr.f32.gmra.mxu0 %v369
    %v437 = vpop.f32.mrf.mxu0
    %v438 = vadd.f32 %v365, %v437
    %v439 = vpop.f32.mrf.mxu0
    %440 = vdwg.mxu0
    %v441 = vld [vmem:[%s5] sm:$0x1]
    %v443 = vlaneseq
    %v444 = vshrl.u32 %v443, 7
    %v445 = vsub.s32 0, %v444
    %v446 = vrot.slane %v441, %v445
    %v448 = vadd.f32 %v438, %v446
    %v449 = vmax.f32 %v448, 0.0
    %v450 = vld [vmem:[#allocation10] sm:$0xff]
    %v451 = vld [vmem:[#allocation10 + $0x8] sm:$0xff]
    %v452 = vld [vmem:[#allocation10 + $0x10] sm:$0xff]
    %v453 = vld [vmem:[#allocation10 + $0x18] sm:$0xff]
    %v454 = vld [vmem:[%s7] sm:$0x1]
    %v456 = vlaneseq
    %v457 = vshrl.u32 %v456, 7
    %v458 = vsub.s32 0, %v457
    %v459 = vrot.slane %v454, %v458
    %v462 = vsel %vm108, %v449, 0
    %464 = vmatprep.subr.mxu0 0.0
    %465 = vmatpush1.msra.mxu0 0.0
    %466 = vmatprep.subr.mxu0 0.0
    %467 = vmatpush1.msra.mxu0 0.0
    %468 = vmatprep.subr.mxu0 0.0
    %469 = vmatpush1.msra.mxu0 0.0
    %470 = vmatprep.subr.mxu0 0.0
    %471 = vmatpush1.msra.mxu0 0.0
    %472 = vmatprep.subr.mxu0 0.0
    %473 = vmatpush1.msra.mxu0 0.0
    %474 = vmatprep.subr.mxu0 0.0
    %475 = vmatpush1.msra.mxu0 0.0
    %476 = vmatprep.subr.mxu0 0.0
    %477 = vmatpush1.msra.mxu0 0.0
    %478 = vmatprep.subr.mxu0 0.0
    %479 = vmatpush1.msra.mxu0 0.0
    %480 = vmatprep.subr.mxu0 0.0
    %481 = vmatpush1.msra.mxu0 0.0
    %482 = vmatprep.subr.mxu0 0.0
    %483 = vmatpush1.msra.mxu0 0.0
    %484 = vmatprep.subr.mxu0 0.0
    %485 = vmatpush1.msra.mxu0 0.0
    %486 = vmatprep.subr.mxu0 0.0
    %487 = vmatpush1.msra.mxu0 0.0
    %488 = vmatprep.subr.mxu0 0.0
    %489 = vmatpush1.msra.mxu0 %v453
    %490 = vmatprep.subr.mxu0 0.0
    %491 = vmatpush1.msra.mxu0 %v452
    %492 = vmatprep.subr.mxu0 0.0
    %493 = vmatpush1.msra.mxu0 %v451
    %494 = vmatprep.subr.mxu0 0.0
    %495 = vmatpush1.msra.mxu0 %v450
    %496 = vmatprep.subr.mxu0 0.0
    %497 = vmatpush2.msra.mxu0 0.0
    %498 = vmatprep.subr.mxu0 0.0
    %499 = vmatpush2.msra.mxu0 0.0
    %500 = vmatprep.subr.mxu0 0.0
    %501 = vmatpush2.msra.mxu0 0.0
    %502 = vmatprep.subr.mxu0 0.0
    %503 = vmatpush2.msra.mxu0 0.0
    %504 = vmatprep.subr.mxu0 0.0
    %505 = vmatpush2.msra.mxu0 0.0
    %506 = vmatprep.subr.mxu0 0.0
    %507 = vmatpush2.msra.mxu0 0.0
    %508 = vmatprep.subr.mxu0 0.0
    %509 = vmatpush2.msra.mxu0 0.0
    %510 = vmatprep.subr.mxu0 0.0
    %511 = vmatpush2.msra.mxu0 0.0
    %512 = vmatprep.subr.mxu0 0.0
    %513 = vmatpush2.msra.mxu0 0.0
    %514 = vmatprep.subr.mxu0 0.0
    %515 = vmatpush2.msra.mxu0 0.0
    %516 = vmatprep.subr.mxu0 0.0
    %517 = vmatpush2.msra.mxu0 0.0
    %518 = vmatprep.subr.mxu0 0.0
    %519 = vmatpush2.msra.mxu0 0.0
    %520 = vmatprep.subr.mxu0 0.0
    %521 = vmatpush2.msra.mxu0 0.0
    %522 = vmatprep.subr.mxu0 0.0
    %523 = vmatpush2.msra.mxu0 0.0
    %524 = vmatprep.subr.mxu0 0.0
    %525 = vmatpush2.msra.mxu0 0.0
    %526 = vmatprep.subr.mxu0 0.0
    %527 = vmatpush2.msra.mxu0 0.0
    %528 = vmatprep.mubr.f32.mxu0 0.0
    %529 = vmatmul.mubr.f32.gmra.mxu0 %v462
    %v530 = vpop.f32.mrf.mxu0
    %v531 = vadd.f32 %v459, %v530
    %v532 = vpop.f32.mrf.mxu0
    %533 = vdwg.mxu0
    %vm534 = vcmask 1041408
    %v535 = vsel %vm534, %v531, -inf
    %536 = vmax.xlane.f32.xlu0 %v535
    %v537 = vpop.xlane.xlu0 %536
    %v538 = vsub.f32 %v531, %v537
    %v539 = vmul.f32 %v538, 1.442695
    %v540 = vpow.pop %v539
    %v541 = vsel %vm534, %v540, 0.0
    %542 = vadd.xlane.f32.xlu0 %v541
    %v543 = vpop.xlane.xlu0 %542
    %v544 = vrcp.pop %v543
    %v545 = vmul.f32 %v540, %v544
    %546 = vst [vmem:[#allocation11] sm:$0x3] %v545
    // Predicated region
    $region54: #{tpu_custom_call.1} parent=1 // pred_check
      _
    $region55: #{tpu_custom_call.1} parent=1 // pred_check_branch
      %548 = sbr.rel (0) target = $region57
    $region56: #{tpu_custom_call.1} parent=1 // pred_region
      %s550 = ssub.s32 32, 32
      %551 = vsyncadd [#allocation4], %s550
      %s553 = sshll.u32 [#allocation11], 4
      %s554 = int_to_ptr.vmem [resolvable:$true] %s553
      %556 = dma.vmem_to_hbm [thread:$0]  %s554, 32, %s8, [#allocation4]
    $region57: #{tpu_custom_call.1} parent=1 // pred_fallthru
      _
    // Predicated region
    $region58: #{tpu_custom_call.1} parent=1 // pred_check
      _
    $region59: #{tpu_custom_call.1} parent=1 // pred_check_branch
      %558 = sbr.rel (0) target = $region61
    $region60: #{tpu_custom_call.1} parent=1 // pred_region
      %559 = dma.done [#allocation4], 32
    $region61: #{tpu_custom_call.1} parent=1 // pred_fallthru
      _
    %560 = vsyncpa [#allocation3], 1
    %561 = vsyncpa [#allocation6], 1
    %562 = vsyncpa [#allocation9], 1
    %563 = vsyncpa [#allocation4], 1

</llo_original>
